<compile_context>
chip_gen: v7x
topology: tpu7x:2x2x1
jax: 0.10.0
libtpu: 0.0.40
codegen_flags: <defaults>
</compile_context>

<pallas_src>
import math

import jax
import jax.numpy as jnp
from jax import lax
from jax.experimental import pallas as pl
from jax.experimental.pallas import tpu as pltpu


def attention_head_kernel(x_ref, wqkv_ref, bqkv_ref, o_ref, q_s, k_s, v_s):
    """Grid = (B, num_q_tiles). One batch element per outer step; q rows tiled."""
    H = o_ref.shape[-1]
    tq = o_ref.shape[1]
    qi = pl.program_id(1)

    # Fused QKV projection: a single MXU push per batch element; the result is
    # cached in VMEM scratch and reused by every q-tile of this batch element.
    @pl.when(qi == 0)
    def _():
        x = x_ref[0]                                            # (S, E)
        qkv = jnp.dot(x, wqkv_ref[...],
                      preferred_element_type=jnp.float32) + bqkv_ref[...]
        q_s[...] = qkv[:, :H]          # 1/sqrt(H) already folded into wq/bq
        k_s[...] = qkv[:, H:2 * H]
        v_s[...] = qkv[:, 2 * H:]

    row0 = qi * tq
    if tq % 8 == 0:
        row0 = pl.multiple_of(row0, 8)
    q = q_s[pl.ds(row0, tq), :]                                 # (tq, H)

    # scores = q @ k^T, contracting the last dims of both operands (no K copy).
    scores = lax.dot_general(
        q, k_s[...],
        dimension_numbers=(((1,), (1,)), ((), ())),
        preferred_element_type=jnp.float32)                     # (tq, S)

    # Numerically stable softmax; reciprocal goes to the (idle) EUP slot.
    m = jnp.max(scores, axis=-1, keepdims=True)
    p = jnp.exp(scores - m)
    denom = jnp.sum(p, axis=-1, keepdims=True)
    weights = p * pl.reciprocal(denom, approx=True)

    out = jnp.dot(weights, v_s[...], preferred_element_type=jnp.float32)
    o_ref[0] = out.astype(o_ref.dtype)


def attention_head(x, wq, bq, wk, bk, wv, bv, *, max_q_tile=256):
    """x: (B, S, E); w*: (E, H); b*: (H,). Returns (B, S, H)."""
    B, S, E = x.shape
    H = wq.shape[1]

    # Fold the attention scale into the Q projection (free at trace time) and
    # fuse the three projections into a single (E, 3H) weight / (1, 3H) bias.
    scale = 1.0 / math.sqrt(H)
    wqkv = jnp.concatenate([wq * scale, wk, wv], axis=1)          # (E, 3H)
    bqkv = jnp.concatenate([bq * scale, bk, bv], axis=0).reshape(1, 3 * H)

    # Tile query rows so the score block is (tq, S) instead of (S, S).
    tq = S if S <= max_q_tile else max_q_tile
    assert S % tq == 0, "sequence length must be divisible by the q tile"
    num_q_tiles = S // tq

    return pl.pallas_call(
        attention_head_kernel,
        out_shape=jax.ShapeDtypeStruct((B, S, H), x.dtype),
        grid=(B, num_q_tiles),
        in_specs=[
            # x: full sequence for one batch element; block index does not
            # change across qi, so it is DMA'd only once per batch element.
            pl.BlockSpec((1, S, E), lambda b, qi: (b, 0, 0)),
            # Fused QKV weight / bias: grid-invariant, stay resident in VMEM.
            pl.BlockSpec((E, 3 * H), lambda b, qi: (0, 0)),
            pl.BlockSpec((1, 3 * H), lambda b, qi: (0, 0)),
        ],
        out_specs=pl.BlockSpec((1, tq, H), lambda b, qi: (b, qi, 0)),
        scratch_shapes=[
            pltpu.VMEM((S, H), jnp.float32),   # Q (scaled)
            pltpu.VMEM((S, H), jnp.float32),   # K
            pltpu.VMEM((S, H), jnp.float32),   # V
        ],
        compiler_params=pltpu.CompilerParams(
            dimension_semantics=("parallel", "arbitrary")),
    )(x, wqkv, bqkv)


def attention_head_reference(x, wq, bq, wk, bk, wv, bv):
    q = jnp.einsum("bse,eh->bsh", x, wq) + bq
    k = jnp.einsum("bse,eh->bsh", x, wk) + bk
    v = jnp.einsum("bse,eh->bsh", x, wv) + bv
    scores = jnp.einsum("bqh,bkh->bqk", q, k) / math.sqrt(q.shape[-1])
    weights = jax.nn.softmax(scores, axis=-1)
    return jnp.einsum("bqk,bkh->bqh", weights, v)


if __name__ == "__main__":
    B, S, E, H = 2, 8, 32, 16  # batch, seq, embed_dim, head_dim

    key = jax.random.PRNGKey(0)
    kx, kq, kk, kv, kbq, kbk, kbv = jax.random.split(key, 7)

    x = jax.random.normal(kx, (B, S, E), dtype=jnp.float32)

    # nn.Linear-style init (weight (H,E) -> stored transposed as (E,H)).
    bound = 1.0 / math.sqrt(E)
    wq = jax.random.uniform(kq, (E, H), jnp.float32, -bound, bound)
    wk = jax.random.uniform(kk, (E, H), jnp.float32, -bound, bound)
    wv = jax.random.uniform(kv, (E, H), jnp.float32, -bound, bound)
    bq = jax.random.uniform(kbq, (H,), jnp.float32, -bound, bound)
    bk = jax.random.uniform(kbk, (H,), jnp.float32, -bound, bound)
    bv = jax.random.uniform(kbv, (H,), jnp.float32, -bound, bound)

    out = attention_head(x, wq, bq, wk, bk, wv, bv)
    out = jax.block_until_ready(out)

    ref = attention_head_reference(x, wq, bq, wk, bk, wv, bv)
    assert out.shape == (B, S, H)
    # Tolerance loosened slightly because of the EUP approximate reciprocal.
    assert jnp.allclose(out, ref, atol=2e-3, rtol=2e-3), "mismatch vs reference"

    print("KERNEL_OK")
</pallas_src>

<mosaic_0001>
module attributes {stable_mosaic.version = 11 : i64} {
  func.func @attention_head_kernel(%arg0: i32, %arg1: i32, %arg2: memref<1x8x32xf32, #tpu.memory_space<vmem>>, %arg3: memref<32x48xf32, #tpu.memory_space<vmem>>, %arg4: memref<1x48xf32, #tpu.memory_space<vmem>>, %arg5: memref<1x8x16xf32, #tpu.memory_space<vmem>>, %arg6: memref<8x16xf32, #tpu.memory_space<vmem>>, %arg7: memref<8x16xf32, #tpu.memory_space<vmem>>, %arg8: memref<8x16xf32, #tpu.memory_space<vmem>>) attributes {dimension_semantics = [#tpu.dimension_semantics<parallel>, #tpu.dimension_semantics<arbitrary>], iteration_bounds = array<i64: 2, 1>, scalar_prefetch = 0 : i64, scratch_operands = 3 : i64, tpu.core_type = #tpu.core_type<tc>, window_params = [{transform_indices = @transform_0, window_bounds = array<i64: 1, 8, 32>}, {pipeline_mode = #tpu.pipeline_mode<synchronous>, transform_indices = @transform_1, window_bounds = array<i64: 32, 48>}, {pipeline_mode = #tpu.pipeline_mode<synchronous>, transform_indices = @transform_2, window_bounds = array<i64: 1, 48>}, {transform_indices = @transform_3, window_bounds = array<i64: 1, 8, 16>}]} {
    %c0_i32 = arith.constant 0 : i32
    %0 = arith.cmpi eq, %arg1, %c0_i32 : i32
    %1 = arith.extui %0 : i1 to i32
    %c0_i32_0 = arith.constant 0 : i32
    %2 = arith.cmpi ne, %1, %c0_i32_0 : i32
    scf.if %2 {
      %c0_11 = arith.constant 0 : index
      %c0_12 = arith.constant 0 : index
      %c0_13 = arith.constant 0 : index
      %24 = vector.load %arg2[%c0_11, %c0_12, %c0_13] : memref<1x8x32xf32, #tpu.memory_space<vmem>>, vector<1x8x32xf32>
      %25 = vector.shape_cast %24 : vector<1x8x32xf32> to vector<8x32xf32>
      %c0_14 = arith.constant 0 : index
      %c0_15 = arith.constant 0 : index
      %26 = vector.load %arg3[%c0_14, %c0_15] : memref<32x48xf32, #tpu.memory_space<vmem>>, vector<32x48xf32>
      %cst_16 = arith.constant dense<0.000000e+00> : vector<8x48xf32>
      %27 = tpu.matmul %25, %26, %cst_16 {dimension_numbers = #tpu.dot_dimension_numbers<[1], [0], [0], [1], [0, 0, 1, 1], [], []>} : vector<8x32xf32>, vector<32x48xf32>, vector<8x48xf32> -> vector<8x48xf32>
      %c0_17 = arith.constant 0 : index
      %c0_18 = arith.constant 0 : index
      %28 = vector.load %arg4[%c0_17, %c0_18] : memref<1x48xf32, #tpu.memory_space<vmem>>, vector<1x48xf32>
      %29 = vector.broadcast %28 : vector<1x48xf32> to vector<8x48xf32>
      %30 = arith.addf %27, %29 : vector<8x48xf32>
      %31 = vector.extract_strided_slice %30 {offsets = [0, 0], sizes = [8, 16], strides = [1, 1]} : vector<8x48xf32> to vector<8x16xf32>
      %c0_19 = arith.constant 0 : index
      %c0_20 = arith.constant 0 : index
      %32 = vector.load %arg6[%c0_19, %c0_20] : memref<8x16xf32, #tpu.memory_space<vmem>>, vector<8x16xf32>
      tpu.vector_store %arg6[%c0_19, %c0_20], %31 {strides = array<i32>} : memref<8x16xf32, #tpu.memory_space<vmem>>, vector<8x16xf32>,
      %33 = vector.extract_strided_slice %30 {offsets = [0, 16], sizes = [8, 16], strides = [1, 1]} : vector<8x48xf32> to vector<8x16xf32>
      %c0_21 = arith.constant 0 : index
      %c0_22 = arith.constant 0 : index
      %34 = vector.load %arg7[%c0_21, %c0_22] : memref<8x16xf32, #tpu.memory_space<vmem>>, vector<8x16xf32>
      tpu.vector_store %arg7[%c0_21, %c0_22], %33 {strides = array<i32>} : memref<8x16xf32, #tpu.memory_space<vmem>>, vector<8x16xf32>,
      %35 = vector.extract_strided_slice %30 {offsets = [0, 32], sizes = [8, 16], strides = [1, 1]} : vector<8x48xf32> to vector<8x16xf32>
      %c0_23 = arith.constant 0 : index
      %c0_24 = arith.constant 0 : index
      %36 = vector.load %arg8[%c0_23, %c0_24] : memref<8x16xf32, #tpu.memory_space<vmem>>, vector<8x16xf32>
      tpu.vector_store %arg8[%c0_23, %c0_24], %35 {strides = array<i32>} : memref<8x16xf32, #tpu.memory_space<vmem>>, vector<8x16xf32>,
    } else {
    }
    %c8_i32 = arith.constant 8 : i32
    %3 = arith.muli %arg1, %c8_i32 : i32
    %4 = tpu.assume_multiple %3, 8 : i32
    %5 = arith.index_cast %4 : i32 to index
    %c0 = arith.constant 0 : index
    %6 = vector.load %arg6[%5, %c0] : memref<8x16xf32, #tpu.memory_space<vmem>>, vector<8x16xf32>
    %c0_1 = arith.constant 0 : index
    %c0_2 = arith.constant 0 : index
    %7 = vector.load %arg7[%c0_1, %c0_2] : memref<8x16xf32, #tpu.memory_space<vmem>>, vector<8x16xf32>
    %cst = arith.constant dense<0.000000e+00> : vector<8x8xf32>
    %8 = tpu.matmul %6, %7, %cst {dimension_numbers = #tpu.dot_dimension_numbers<[1], [1], [0], [0], [0, 0, 1, 0], [], []>} : vector<8x16xf32>, vector<8x16xf32>, vector<8x8xf32> -> vector<8x8xf32>
    %cst_3 = arith.constant dense<0xFF800000> : vector<8xf32>
    %9 = vector.multi_reduction <maximumf>, %8, %cst_3 [1] : vector<8x8xf32> to vector<8xf32>
    %10 = vector.shape_cast %9 : vector<8xf32> to vector<8x1xf32>
    %11 = vector.broadcast %10 : vector<8x1xf32> to vector<8x8xf32>
    %12 = arith.subf %8, %11 : vector<8x8xf32>
    %13 = math.exp %12 : vector<8x8xf32>
    %cst_4 = arith.constant dense<0.000000e+00> : vector<8xf32>
    %14 = vector.multi_reduction <add>, %13, %cst_4 [1] : vector<8x8xf32> to vector<8xf32>
    %15 = vector.shape_cast %14 : vector<8xf32> to vector<8x1xf32>
    %16 = tpu.reciprocal %15 {approx = true} : vector<8x1xf32> -> vector<8x1xf32>
    %17 = vector.broadcast %16 : vector<8x1xf32> to vector<8x8xf32>
    %18 = arith.mulf %13, %17 : vector<8x8xf32>
    %c0_5 = arith.constant 0 : index
    %c0_6 = arith.constant 0 : index
    %19 = vector.load %arg8[%c0_5, %c0_6] : memref<8x16xf32, #tpu.memory_space<vmem>>, vector<8x16xf32>
    %cst_7 = arith.constant dense<0.000000e+00> : vector<8x16xf32>
    %20 = tpu.matmul %18, %19, %cst_7 {dimension_numbers = #tpu.dot_dimension_numbers<[1], [0], [0], [1], [0, 0, 1, 1], [], []>} : vector<8x8xf32>, vector<8x16xf32>, vector<8x16xf32> -> vector<8x16xf32>
    %c0_8 = arith.constant 0 : index
    %c0_9 = arith.constant 0 : index
    %c0_10 = arith.constant 0 : index
    %21 = vector.load %arg5[%c0_8, %c0_9, %c0_10] : memref<1x8x16xf32, #tpu.memory_space<vmem>>, vector<1x8x16xf32>
    %22 = vector.shape_cast %21 : vector<1x8x16xf32> to vector<8x16xf32>
    %23 = vector.shape_cast %20 : vector<8x16xf32> to vector<1x8x16xf32>
    tpu.vector_store %arg5[%c0_8, %c0_9, %c0_10], %23 {strides = array<i32>} : memref<1x8x16xf32, #tpu.memory_space<vmem>>, vector<1x8x16xf32>,
    return
  }
  func.func @transform_0(%arg0: i32, %arg1: i32) -> (i32, i32, i32) {
    %c0_i32 = arith.constant 0 : i32
    %c0_i32_0 = arith.constant 0 : i32
    %c0_i32_1 = arith.constant 0 : i32
    return %arg0, %c0_i32, %c0_i32_0 : i32, i32, i32
  }
  func.func @transform_1(%arg0: i32, %arg1: i32) -> (i32, i32) {
    %c0_i32 = arith.constant 0 : i32
    %c0_i32_0 = arith.constant 0 : i32
    %c0_i32_1 = arith.constant 0 : i32
    return %c0_i32, %c0_i32_0 : i32, i32
  }
  func.func @transform_2(%arg0: i32, %arg1: i32) -> (i32, i32) {
    %c0_i32 = arith.constant 0 : i32
    %c0_i32_0 = arith.constant 0 : i32
    %c0_i32_1 = arith.constant 0 : i32
    return %c0_i32, %c0_i32_0 : i32, i32
  }
  func.func @transform_3(%arg0: i32, %arg1: i32) -> (i32, i32, i32) {
    %c0_i32 = arith.constant 0 : i32
    %c0_i32_0 = arith.constant 0 : i32
    return %arg0, %arg1, %c0_i32 : i32, i32, i32
  }
}

</mosaic_0001>

<llo_original>
// kernel: tpu_custom_call.1
$region0: #{tpu_custom_call.1}
  #allocation0 [shape = 'u32[]', space=smem, size = 0x4, offset = 0x4, fixed_abs, tag = 'smem constant byte address 0x4 - core index']
  #allocation1 [shape = 'u32[144,128]{1,0:T(1,128)}', space=vmem, size = 0x12000, scoped, tag = 'internal scratch']
  #allocation2 [shape = 'f32[8,16]{1,0:T(8,128)}', space=vmem, size = 0x1000, scoped, tag = 'scratch operand']
  #allocation3 [shape = 'f32[8,16]{1,0:T(8,128)}', space=vmem, size = 0x1000, scoped, tag = 'scratch operand']
  #allocation4 [shape = 'f32[8,16]{1,0:T(8,128)}', space=vmem, size = 0x1000, scoped, tag = 'scratch operand']
  %s0 = inlined_call_operand.hbm [shape: f32[2,8,32], index: 0, kind: input, shape index: {}]
  %s1 = inlined_call_operand.hbm [shape: f32[32,48], index: 1, kind: input, shape index: {}]
  %s2 = inlined_call_operand.vmem [shape: f32[1,48], index: 2, kind: input, shape index: {}]
  %s3 = inlined_call_operand.hbm [shape: f32[2,8,16], index: 3, kind: output, shape index: {}]
  %s4 = sld [smem:[#allocation0]]
  $region57: #{tpu_custom_call.1} parent=0
    _
  %s6 = ssub.s32 1, %s4
  %s7 = scalar_select 0, %s6, %s4
  $region1: #{tpu_custom_call.1} parent=0
    #allocation5 [shape = 'u8[8192]{0}', space=vmem, size = 0x2000, scoped, tag = 'input window, operand 0']
    #allocation6 [shape = 's32[2]{0}', space=sflag, size = 0x8, scoped, tag = 'scoped memory for tpu_custom_call.1']
    #allocation7 [shape = 's32[2]{0}', space=sflag, size = 0x8, scoped, tag = 'scoped memory for tpu_custom_call.1']
    #allocation8 [shape = 'u8[16384]{0}', space=vmem, size = 0x4000, scoped, tag = 'input window, operand 1, single buffered']
    #allocation9 [shape = 's32[1]{0}', space=sflag, size = 0x4, scoped, tag = 'scoped memory for tpu_custom_call.1']
    #allocation10 [shape = 'u8[8192]{0}', space=vmem, size = 0x2000, scoped, tag = 'output window, operand 0']
    %8 = vsyncpa [#allocation6], 0
    %s9 = scalar_lea.sflag [#allocation6], 1
    %10 = vsyncpa %s9, 0
    %11 = vsyncpa [#allocation9], 0
    %12 = vsyncpa [#allocation7], 0
    %s13 = scalar_lea.sflag [#allocation7], 1
    %14 = vsyncpa %s13, 0
    loop: start=0, step=1, limit=4
    $region2: #{tpu_custom_call.1} parent=1 // loop_pre_header
      _
    $region3: #{tpu_custom_call.1} parent=1 // loop_header
      %s16 = sphi 0, %s20
      %p17 = scmp.ge.s32.totalorder %s16, 4
      %s23 = sphi 0, %s35
      %s24 = sphi 0, %s31
      %s25 = sphi 0, %s23
      %s26 = sphi 0, %s24
      %s27 = sphi 0, %s25
      %s28 = sphi 0, %s26
      %s38 = sphi 0, %s40
      %s41 = sphi 0, %s38
      %s42 = sphi 0, %s41
      %s58 = sphi 0, %s42
      %s62 = sphi 0, %s62
      %s64 = sphi 0, %s62
      %s65 = sphi 0, %s64
      %s79 = sphi 0, %s65
      %s83 = sphi 0, %s83
      %s85 = sphi 0, %s83
      %s86 = sphi 0, %s85
      %s100 = sphi 0, %s86
      %s108 = sphi 0, %s110
      %s111 = sphi 0, %s108
      %s112 = sphi 0, %s111
      %s128 = sphi 0, %s112
    $region4: #{tpu_custom_call.1} parent=1 // loop_header_branch
      %19 = sbr.rel (%p17) target = $region8
    $region5: #{tpu_custom_call.1} parent=1 // loop_body
      %s21 = ssub.s32 %s16, 1
      %s22 = ssub.s32 %s16, 2
      %s29 = sadd.s32 1, %s24
      %p30 = scmp.ge.s32.totalorder %s29, 1
      %s31 = scalar_select %p30, 0, %s29
      %s32 = sadd.s32 1, %s23
      %s33 = scalar_select %p30, %s32, %s23
      %p34 = scmp.ge.s32.totalorder %s33, 2
      %s35 = scalar_select %p34, 0, %s33
      %s36 = ssub.s32 %s23, %s35
      %p37 = scmp.eq.s32.totalorder %s36, 0
      %s39 = sadd.s32 %s38, 1
      %s40 = scalar_select %p37, %s38, %s39
      %p43 = pneg %p37
      %p44 = scmp.eq.s32.totalorder %s16, 1
      %p45 = por %p43, %p44
      %p46 = scmp.ne.s32.totalorder %s38, %s41
      %p47 = scmp.eq.s32.totalorder %s16, 0
      %p48 = por %p46, %p47
      %p49 = scmp.ne.s32.totalorder %s38, %s41
      %p50 = scmp.eq.s32.totalorder %s21, 1
      %p51 = por %p49, %p50
      %p52 = scmp.ne.s32.totalorder %s41, %s42
      %p53 = scmp.eq.s32.totalorder %s21, 0
      %p54 = por %p52, %p53
      %p55 = scmp.ne.s32.totalorder %s41, %s42
      %p56 = scmp.eq.s32.totalorder %s22, 1
      %p57 = por %p55, %p56
      %p59 = scmp.ne.s32.totalorder %s42, %s58
      %p60 = scmp.eq.s32.totalorder %s22, 0
      %p61 = por %p59, %p60
      %s63 = sadd.s32 %s62, 1
      %p66 = scmp.eq.s32.totalorder %s16, 1
      %p67 = scmp.ne.s32.totalorder %s62, %s64
      %p68 = scmp.eq.s32.totalorder %s16, 0
      %p69 = por %p67, %p68
      %p70 = scmp.ne.s32.totalorder %s62, %s64
      %p71 = scmp.eq.s32.totalorder %s21, 1
      %p72 = por %p70, %p71
      %p73 = scmp.ne.s32.totalorder %s64, %s65
      %p74 = scmp.eq.s32.totalorder %s21, 0
      %p75 = por %p73, %p74
      %p76 = scmp.ne.s32.totalorder %s64, %s65
      %p77 = scmp.eq.s32.totalorder %s22, 1
      %p78 = por %p76, %p77
      %p80 = scmp.ne.s32.totalorder %s65, %s79
      %p81 = scmp.eq.s32.totalorder %s22, 0
      %p82 = por %p80, %p81
      %s84 = sadd.s32 %s83, 1
      %p87 = scmp.eq.s32.totalorder %s16, 1
      %p88 = scmp.ne.s32.totalorder %s83, %s85
      %p89 = scmp.eq.s32.totalorder %s16, 0
      %p90 = por %p88, %p89
      %p91 = scmp.ne.s32.totalorder %s83, %s85
      %p92 = scmp.eq.s32.totalorder %s21, 1
      %p93 = por %p91, %p92
      %p94 = scmp.ne.s32.totalorder %s85, %s86
      %p95 = scmp.eq.s32.totalorder %s21, 0
      %p96 = por %p94, %p95
      %p97 = scmp.ne.s32.totalorder %s85, %s86
      %p98 = scmp.eq.s32.totalorder %s22, 1
      %p99 = por %p97, %p98
      %p101 = scmp.ne.s32.totalorder %s86, %s100
      %p102 = scmp.eq.s32.totalorder %s22, 0
      %p103 = por %p101, %p102
      %s104 = ssub.s32 %s23, %s35
      %s105 = ssub.s32 %s24, %s31
      %s106 = sor.u32 %s104, %s105
      %p107 = scmp.eq.s32.totalorder %s106, 0
      %s109 = sadd.s32 %s108, 1
      %s110 = scalar_select %p107, %s108, %s109
      %p113 = pneg %p107
      %p114 = scmp.eq.s32.totalorder %s16, 1
      %p115 = por %p113, %p114
      %p116 = scmp.ne.s32.totalorder %s108, %s111
      %p117 = scmp.eq.s32.totalorder %s16, 0
      %p118 = por %p116, %p117
      %p119 = scmp.ne.s32.totalorder %s108, %s111
      %p120 = scmp.eq.s32.totalorder %s21, 1
      %p121 = por %p119, %p120
      %p122 = scmp.ne.s32.totalorder %s111, %s112
      %p123 = scmp.eq.s32.totalorder %s21, 0
      %p124 = por %p122, %p123
      %p125 = scmp.ne.s32.totalorder %s111, %s112
      %p126 = scmp.eq.s32.totalorder %s22, 1
      %p127 = por %p125, %p126
      %p129 = scmp.ne.s32.totalorder %s112, %s128
      %p130 = scmp.eq.s32.totalorder %s22, 0
      %p131 = por %p129, %p130
      %p132 = scmp.le.s32.totalorder 1, %s16
      %p133 = scmp.lt.s32.totalorder %s16, 3
      %p134 = pnand %p132, %p133
      %p135 = pneg %p134
      // Predicated region
      $region9: #{tpu_custom_call.1} parent=5 // pred_check
        _
      $region10: #{tpu_custom_call.1} parent=5 // pred_check_branch
        %137 = sbr.rel (%p134) target = $region12
      $region11: #{tpu_custom_call.1} parent=5 // pred_region
        %s138 = ssub.s32 %s16, 1
        // Predicated region
        $region13: #{tpu_custom_call.1} parent=11 // pred_check
          %p139 = pneg %p75
        $region14: #{tpu_custom_call.1} parent=11 // pred_check_branch
          %141 = sbr.rel (%p139) target = $region16
        $region15: #{tpu_custom_call.1} parent=11 // pred_region
          %s143 = ssub.s32 512, 512
          %144 = vsyncadd [#allocation9], %s143
          %s145 = sshll.u32 [#allocation8], 4
          %s146 = int_to_ptr.vmem [resolvable:$true] %s145
          %151 = dma.hbm_to_vmem [thread:$0]  %s1, 512, %s146, [#allocation9], 128, 128, 8
        $region16: #{tpu_custom_call.1} parent=11 // pred_fallthru
          _
        // Predicated region
        $region17: #{tpu_custom_call.1} parent=11 // pred_check
          %p152 = pneg %p96
        $region18: #{tpu_custom_call.1} parent=11 // pred_check_branch
          %154 = sbr.rel (%p152) target = $region20
        $region19: #{tpu_custom_call.1} parent=11 // pred_region
          _
        $region20: #{tpu_custom_call.1} parent=11 // pred_fallthru
          _
      $region12: #{tpu_custom_call.1} parent=5 // pred_fallthru
        _
      %p155 = scmp.lt.s32.totalorder %s16, 2
      // Predicated region
      $region21: #{tpu_custom_call.1} parent=5 // pred_check
        %p156 = pneg %p155
      $region22: #{tpu_custom_call.1} parent=5 // pred_check_branch
        %158 = sbr.rel (%p156) target = $region24
      $region23: #{tpu_custom_call.1} parent=5 // pred_region
        // Predicated region
        $region25: #{tpu_custom_call.1} parent=23 // pred_check
          %p159 = pneg %p48
        $region26: #{tpu_custom_call.1} parent=23 // pred_check_branch
          %161 = sbr.rel (%p159) target = $region28
        $region27: #{tpu_custom_call.1} parent=23 // pred_region
          %s162 = sand.u32 %s38, 1
          %s163 = scalar_lea.sflag [#allocation6], %s162
          %s164 = sand.u32 %s38, 1
          %s165 = smul.addr %s164, 8
          %s166 = scalar_lea.vmem [#allocation5], %s165
          %s168 = ssub.s32 128, 128
          %169 = vsyncadd %s163, %s168
          %s170 = smul.addr %s23, 128
          %s171 = scalar_lea.hbm %s0, %s170
          %s173 = sshll.u32 %s166, 4
          %s174 = int_to_ptr.vmem [resolvable:$true] %s173
          %176 = dma.hbm_to_vmem [thread:$0]  %s171, 128, %s174, %s163
        $region28: #{tpu_custom_call.1} parent=23 // pred_fallthru
          _
      $region24: #{tpu_custom_call.1} parent=5 // pred_fallthru
        _
      %p177 = scmp.le.s32.totalorder 1, %s16
      %p178 = scmp.lt.s32.totalorder %s16, 3
      %p179 = pnand %p177, %p178
      %p180 = pneg %p179
      // Predicated region
      $region29: #{tpu_custom_call.1} parent=5 // pred_check
        _
      $region30: #{tpu_custom_call.1} parent=5 // pred_check_branch
        %182 = sbr.rel (%p179) target = $region32
      $region31: #{tpu_custom_call.1} parent=5 // pred_region
        %s183 = ssub.s32 %s16, 1
        %s184 = sand.u32 %s41, 1
        %s185 = scalar_lea.sflag [#allocation6], %s184
        %s186 = sand.u32 %s41, 1
        %s187 = smul.addr %s186, 8
        %s188 = scalar_lea.vmem [#allocation5], %s187
        // Predicated region
        $region33: #{tpu_custom_call.1} parent=31 // pred_check
          %p189 = pneg %p54
        $region34: #{tpu_custom_call.1} parent=31 // pred_check_branch
          %191 = sbr.rel (%p189) target = $region36
        $region35: #{tpu_custom_call.1} parent=31 // pred_region
          %192 = dma.done %s185, 128
        $region36: #{tpu_custom_call.1} parent=31 // pred_fallthru
          _
        // Predicated region
        $region37: #{tpu_custom_call.1} parent=31 // pred_check
          %p193 = pneg %p75
        $region38: #{tpu_custom_call.1} parent=31 // pred_check_branch
          %195 = sbr.rel (%p193) target = $region40
        $region39: #{tpu_custom_call.1} parent=31 // pred_region
          %196 = dma.done [#allocation9], 512
        $region40: #{tpu_custom_call.1} parent=31 // pred_fallthru
          _
        %s197 = sand.u32 %s41, 1
        %s198 = scalar_lea.sflag [#allocation6], %s197
        %s199 = sand.u32 %s41, 1
        %s200 = smul.addr %s199, 8
        %s201 = scalar_lea.vmem [#allocation5], %s200
        %p202 = pneg %p54
        %p203 = pneg %p51
        %p204 = pneg %p75
        %p205 = pneg %p72
        %p206 = pneg %p96
        %p207 = pneg %p93
        %p208 = pneg %p124
        %p209 = pneg %p121
        %s210 = sand.u32 %s111, 1
        %s211 = scalar_lea.sflag [#allocation7], %s210
        %s212 = sand.u32 %s111, 1
        %s213 = smul.addr %s212, 8
        %s214 = scalar_lea.vmem [#allocation10], %s213
        %p215 = scmp.eq.s32.totalorder %s26, 0
        // Predicated region
        $region41: #{tpu_custom_call.1} parent=31 // pred_check
          %p216 = pneg %p215
        $region42: #{tpu_custom_call.1} parent=31 // pred_check_branch
          %218 = sbr.rel (%p216) target = $region44
        $region43: #{tpu_custom_call.1} parent=31 // pred_region
          %v219 = vld [vmem:[%s188] sm:$0xff]
          %v220 = vld [vmem:[#allocation8] sm:$0xff]
          %v221 = vld [vmem:[#allocation8 + $0x8] sm:$0xff]
          %v222 = vld [vmem:[#allocation8 + $0x10] sm:$0xff]
          %v223 = vld [vmem:[#allocation8 + $0x18] sm:$0xff]
          %v224 = vld [vmem:[%s2] sm:$0x1]
          %v226 = vlaneseq
          %v227 = vshrl.u32 %v226, 7
          %v228 = vsub.s32 0, %v227
          %v229 = vrot.slane %v224, %v228
          %vm231 = vcmask 261120
          %v233 = vsel %vm231, %v219, 0
          %235 = vmatprep.subr.mxu0 0.0
          %236 = vmatpush1.msra.mxu0 %v220
          %237 = vmatprep.subr.mxu0 0.0
          %238 = vmatpush1.msra.mxu0 %v221
          %239 = vmatprep.subr.mxu0 0.0
          %240 = vmatpush1.msra.mxu0 %v222
          %241 = vmatprep.subr.mxu0 0.0
          %242 = vmatpush1.msra.mxu0 %v223
          %243 = vmatprep.subr.mxu0 0.0
          %244 = vmatpush1.msra.mxu0 0.0
          %245 = vmatprep.subr.mxu0 0.0
          %246 = vmatpush1.msra.mxu0 0.0
          %247 = vmatprep.subr.mxu0 0.0
          %248 = vmatpush1.msra.mxu0 0.0
          %249 = vmatprep.subr.mxu0 0.0
          %250 = vmatpush1.msra.mxu0 0.0
          %251 = vmatprep.subr.mxu0 0.0
          %252 = vmatpush1.msra.mxu0 0.0
          %253 = vmatprep.subr.mxu0 0.0
          %254 = vmatpush1.msra.mxu0 0.0
          %255 = vmatprep.subr.mxu0 0.0
          %256 = vmatpush1.msra.mxu0 0.0
          %257 = vmatprep.subr.mxu0 0.0
          %258 = vmatpush1.msra.mxu0 0.0
          %259 = vmatprep.subr.mxu0 0.0
          %260 = vmatpush1.msra.mxu0 0.0
          %261 = vmatprep.subr.mxu0 0.0
          %262 = vmatpush1.msra.mxu0 0.0
          %263 = vmatprep.subr.mxu0 0.0
          %264 = vmatpush1.msra.mxu0 0.0
          %265 = vmatprep.subr.mxu0 0.0
          %266 = vmatpush1.msra.mxu0 0.0
          %267 = vmatprep.subr.mxu0 0.0
          %268 = vmatpush1.msra.mxu0 0.0
          %269 = vmatprep.subr.mxu0 0.0
          %270 = vmatpush1.msra.mxu0 0.0
          %271 = vmatprep.subr.mxu0 0.0
          %272 = vmatpush1.msra.mxu0 0.0
          %273 = vmatprep.subr.mxu0 0.0
          %274 = vmatpush1.msra.mxu0 0.0
          %275 = vmatprep.subr.mxu0 0.0
          %276 = vmatpush1.msra.mxu0 0.0
          %277 = vmatprep.subr.mxu0 0.0
          %278 = vmatpush1.msra.mxu0 0.0
          %279 = vmatprep.subr.mxu0 0.0
          %280 = vmatpush1.msra.mxu0 0.0
          %281 = vmatprep.subr.mxu0 0.0
          %282 = vmatpush1.msra.mxu0 0.0
          %283 = vmatprep.subr.mxu0 0.0
          %284 = vmatpush1.msra.mxu0 0.0
          %285 = vmatprep.subr.mxu0 0.0
          %286 = vmatpush1.msra.mxu0 0.0
          %287 = vmatprep.subr.mxu0 0.0
          %288 = vmatpush1.msra.mxu0 0.0
          %289 = vmatprep.subr.mxu0 0.0
          %290 = vmatpush1.msra.mxu0 0.0
          %291 = vmatprep.subr.mxu0 0.0
          %292 = vmatpush1.msra.mxu0 0.0
          %293 = vmatprep.subr.mxu0 0.0
          %294 = vmatpush1.msra.mxu0 0.0
          %295 = vmatprep.subr.mxu0 0.0
          %296 = vmatpush1.msra.mxu0 0.0
          %297 = vmatprep.subr.mxu0 0.0
          %298 = vmatpush1.msra.mxu0 0.0
          %299 = vmatprep.mubr.f32.mxu0 0.0
          %300 = vmatmul.mubr.f32.gmra.mrb[0].mxu0 %v233
          %v301 = vpop.f32.mrb[0].mxu0
          %v302 = vadd.f32 %v229, %v301
          %v303 = vpop.f32.mrb[0].mxu0
          %304 = vdwg.mxu0
          %vm305 = vcmask 130048
          %306 = vst.msk [vmem:[#allocation2] sm:$0xff] %vm305, %v302
          %308 = vrot.lane.b32.xlu0 %v302, 112
          %v309 = vpop.permute.xlu0 %308
          %311 = vst.msk [vmem:[#allocation3] sm:$0xff] %vm305, %v309
          %312 = vrot.lane.b32.xlu0 %v302, 96
          %v313 = vpop.permute.xlu0 %312
          %315 = vst.msk [vmem:[#allocation4] sm:$0xff] %vm305, %v313
        $region44: #{tpu_custom_call.1} parent=31 // pred_fallthru
          _
        %s316 = smul.u32 %s26, 8
        %s317 = scalar_lea.vmem [#allocation2], %s316
        %v318 = vld [vmem:[%s317] sm:$0xff]
        %v319 = vld [vmem:[#allocation3] sm:$0xff]
        %vm320 = vcmask 130048
        %v322 = vsel %vm320, %v318, 0
        %v325 = vsel %vm320, %v319, 0
        %327 = vmatprep.subr.mxu0 0.0
        %328 = vmatpush1.xpose.msra.mxu0 %v325
        %329 = vmatprep.subr.mxu0 0.0
        %330 = vmatpush1.xpose.msra.mxu0 0.0
        %331 = vmatprep.subr.mxu0 0.0
        %332 = vmatpush1.xpose.msra.mxu0 0.0
        %333 = vmatprep.subr.mxu0 0.0
        %334 = vmatpush1.xpose.msra.mxu0 0.0
        %335 = vmatprep.subr.mxu0 0.0
        %336 = vmatpush1.xpose.msra.mxu0 0.0
        %337 = vmatprep.subr.mxu0 0.0
        %338 = vmatpush1.xpose.msra.mxu0 0.0
        %339 = vmatprep.subr.mxu0 0.0
        %340 = vmatpush1.xpose.msra.mxu0 0.0
        %341 = vmatprep.subr.mxu0 0.0
        %342 = vmatpush1.xpose.msra.mxu0 0.0
        %343 = vmatprep.subr.mxu0 0.0
        %344 = vmatpush1.xpose.msra.mxu0 0.0
        %345 = vmatprep.subr.mxu0 0.0
        %346 = vmatpush1.xpose.msra.mxu0 0.0
        %347 = vmatprep.subr.mxu0 0.0
        %348 = vmatpush1.xpose.msra.mxu0 0.0
        %349 = vmatprep.subr.mxu0 0.0
        %350 = vmatpush1.xpose.msra.mxu0 0.0
        %351 = vmatprep.subr.mxu0 0.0
        %352 = vmatpush1.xpose.msra.mxu0 0.0
        %353 = vmatprep.subr.mxu0 0.0
        %354 = vmatpush1.xpose.msra.mxu0 0.0
        %355 = vmatprep.subr.mxu0 0.0
        %356 = vmatpush1.xpose.msra.mxu0 0.0
        %357 = vmatprep.subr.mxu0 0.0
        %358 = vmatpush1.xpose.msra.mxu0 0.0
        %359 = vmatprep.subr.mxu0 0.0
        %360 = vmatpush1.xpose.msra.mxu0 0.0
        %361 = vmatprep.subr.mxu0 0.0
        %362 = vmatpush1.xpose.msra.mxu0 0.0
        %363 = vmatprep.subr.mxu0 0.0
        %364 = vmatpush1.xpose.msra.mxu0 0.0
        %365 = vmatprep.subr.mxu0 0.0
        %366 = vmatpush1.xpose.msra.mxu0 0.0
        %367 = vmatprep.subr.mxu0 0.0
        %368 = vmatpush1.xpose.msra.mxu0 0.0
        %369 = vmatprep.subr.mxu0 0.0
        %370 = vmatpush1.xpose.msra.mxu0 0.0
        %371 = vmatprep.subr.mxu0 0.0
        %372 = vmatpush1.xpose.msra.mxu0 0.0
        %373 = vmatprep.subr.mxu0 0.0
        %374 = vmatpush1.xpose.msra.mxu0 0.0
        %375 = vmatprep.subr.mxu0 0.0
        %376 = vmatpush1.xpose.msra.mxu0 0.0
        %377 = vmatprep.subr.mxu0 0.0
        %378 = vmatpush1.xpose.msra.mxu0 0.0
        %379 = vmatprep.subr.mxu0 0.0
        %380 = vmatpush1.xpose.msra.mxu0 0.0
        %381 = vmatprep.subr.mxu0 0.0
        %382 = vmatpush1.xpose.msra.mxu0 0.0
        %383 = vmatprep.subr.mxu0 0.0
        %384 = vmatpush1.xpose.msra.mxu0 0.0
        %385 = vmatprep.subr.mxu0 0.0
        %386 = vmatpush1.xpose.msra.mxu0 0.0
        %387 = vmatprep.subr.mxu0 0.0
        %388 = vmatpush1.xpose.msra.mxu0 0.0
        %389 = vmatprep.subr.mxu0 0.0
        %390 = vmatpush1.xpose.msra.mxu0 0.0
        %391 = vmatprep.mubr.f32.mxu0 0.0
        %392 = vmatmul.mubr.f32.gmra.mrb[0].mxu0 %v322
        %v393 = vpop.f32.mrb[0].mxu0
        %v394 = vadd.f32 0.0, %v393
        %v395 = vpop.f32.mrb[0].mxu0
        %396 = vdwg.mxu0
        %vm397 = vcmask 64512
        %v398 = vsel %vm397, %v394, -inf
        %399 = vmax.xlane.f32.xlu0 %v398
        %v400 = vpop.xlane.xlu0 %399
        %v401 = vsub.f32 %v394, %v400
        %v402 = vmul.f32 %v401, 1.442695
        %v403 = vpow.pop %v402
        %v404 = vsel %vm397, %v403, 0.0
        %405 = vadd.xlane.f32.xlu0 %v404
        %v406 = vpop.xlane.xlu0 %405
        %v407 = vrcp.pop %v406
        %v408 = vmul.f32 %v403, %v407
        %v409 = vld [vmem:[#allocation4] sm:$0xff]
        %v411 = vsel %vm397, %v408, 0
        %413 = vmatprep.subr.mxu0 0.0
        %414 = vmatpush1.msra.mxu0 %v409
        %415 = vmatprep.subr.mxu0 0.0
        %416 = vmatpush1.msra.mxu0 0.0
        %417 = vmatprep.subr.mxu0 0.0
        %418 = vmatpush1.msra.mxu0 0.0
        %419 = vmatprep.subr.mxu0 0.0
        %420 = vmatpush1.msra.mxu0 0.0
        %421 = vmatprep.subr.mxu0 0.0
        %422 = vmatpush1.msra.mxu0 0.0
        %423 = vmatprep.subr.mxu0 0.0
        %424 = vmatpush1.msra.mxu0 0.0
        %425 = vmatprep.subr.mxu0 0.0
        %426 = vmatpush1.msra.mxu0 0.0
        %427 = vmatprep.subr.mxu0 0.0
        %428 = vmatpush1.msra.mxu0 0.0
        %429 = vmatprep.subr.mxu0 0.0
        %430 = vmatpush1.msra.mxu0 0.0
        %431 = vmatprep.subr.mxu0 0.0
        %432 = vmatpush1.msra.mxu0 0.0
        %433 = vmatprep.subr.mxu0 0.0
        %434 = vmatpush1.msra.mxu0 0.0
        %435 = vmatprep.subr.mxu0 0.0
        %436 = vmatpush1.msra.mxu0 0.0
        %437 = vmatprep.subr.mxu0 0.0
        %438 = vmatpush1.msra.mxu0 0.0
        %439 = vmatprep.subr.mxu0 0.0
        %440 = vmatpush1.msra.mxu0 0.0
        %441 = vmatprep.subr.mxu0 0.0
        %442 = vmatpush1.msra.mxu0 0.0
        %443 = vmatprep.subr.mxu0 0.0
        %444 = vmatpush1.msra.mxu0 0.0
        %445 = vmatprep.subr.mxu0 0.0
        %446 = vmatpush1.msra.mxu0 0.0
        %447 = vmatprep.subr.mxu0 0.0
        %448 = vmatpush1.msra.mxu0 0.0
        %449 = vmatprep.subr.mxu0 0.0
        %450 = vmatpush1.msra.mxu0 0.0
        %451 = vmatprep.subr.mxu0 0.0
        %452 = vmatpush1.msra.mxu0 0.0
        %453 = vmatprep.subr.mxu0 0.0
        %454 = vmatpush1.msra.mxu0 0.0
        %455 = vmatprep.subr.mxu0 0.0
        %456 = vmatpush1.msra.mxu0 0.0
        %457 = vmatprep.subr.mxu0 0.0
        %458 = vmatpush1.msra.mxu0 0.0
        %459 = vmatprep.subr.mxu0 0.0
        %460 = vmatpush1.msra.mxu0 0.0
        %461 = vmatprep.subr.mxu0 0.0
        %462 = vmatpush1.msra.mxu0 0.0
        %463 = vmatprep.subr.mxu0 0.0
        %464 = vmatpush1.msra.mxu0 0.0
        %465 = vmatprep.subr.mxu0 0.0
        %466 = vmatpush1.msra.mxu0 0.0
        %467 = vmatprep.subr.mxu0 0.0
        %468 = vmatpush1.msra.mxu0 0.0
        %469 = vmatprep.subr.mxu0 0.0
        %470 = vmatpush1.msra.mxu0 0.0
        %471 = vmatprep.subr.mxu0 0.0
        %472 = vmatpush1.msra.mxu0 0.0
        %473 = vmatprep.subr.mxu0 0.0
        %474 = vmatpush1.msra.mxu0 0.0
        %475 = vmatprep.subr.mxu0 0.0
        %476 = vmatpush1.msra.mxu0 0.0
        %477 = vmatprep.mubr.f32.mxu0 0.0
        %478 = vmatmul.mubr.f32.gmra.mrb[0].mxu0 %v411
        %v479 = vpop.f32.mrb[0].mxu0
        %v480 = vadd.f32 0.0, %v479
        %v481 = vpop.f32.mrb[0].mxu0
        %482 = vdwg.mxu0
        %483 = vst.msk [vmem:[%s214] sm:$0xff] %vm320, %v480
        %s484 = sand.u32 %s111, 1
        %s485 = scalar_lea.sflag [#allocation7], %s484
        %s486 = sand.u32 %s111, 1
        %s487 = smul.addr %s486, 8
        %s488 = scalar_lea.vmem [#allocation10], %s487
        // Predicated region
        $region45: #{tpu_custom_call.1} parent=31 // pred_check
          %p489 = pneg %p121
        $region46: #{tpu_custom_call.1} parent=31 // pred_check_branch
          %491 = sbr.rel (%p489) target = $region48
        $region47: #{tpu_custom_call.1} parent=31 // pred_region
          %s493 = ssub.s32 128, 128
          %494 = vsyncadd %s485, %s493
          %s495 = sadd.s32 %s26, %s25
          %s496 = smul.addr %s495, 128
          %s497 = scalar_lea.hbm %s3, %s496
          %s499 = sshll.u32 %s488, 4
          %s500 = int_to_ptr.vmem [resolvable:$true] %s499
          %502 = dma.vmem_to_hbm [thread:$0]  %s500, 128, %s497, %s485
        $region48: #{tpu_custom_call.1} parent=31 // pred_fallthru
          _
      $region32: #{tpu_custom_call.1} parent=5 // pred_fallthru
        _
      %p503 = scmp.le.s32.totalorder 2, %s16
      // Predicated region
      $region49: #{tpu_custom_call.1} parent=5 // pred_check
        %p504 = pneg %p503
      $region50: #{tpu_custom_call.1} parent=5 // pred_check_branch
        %506 = sbr.rel (%p504) target = $region52
      $region51: #{tpu_custom_call.1} parent=5 // pred_region
        %s507 = ssub.s32 %s16, 2
        // Predicated region
        $region53: #{tpu_custom_call.1} parent=51 // pred_check
          %p508 = pneg %p127
        $region54: #{tpu_custom_call.1} parent=51 // pred_check_branch
          %510 = sbr.rel (%p508) target = $region56
        $region55: #{tpu_custom_call.1} parent=51 // pred_region
          %s511 = sand.u32 %s112, 1
          %s512 = scalar_lea.sflag [#allocation7], %s511
          %s513 = sand.u32 %s112, 1
          %s514 = smul.addr %s513, 8
          %s515 = scalar_lea.vmem [#allocation10], %s514
          %516 = dma.done %s512, 128
        $region56: #{tpu_custom_call.1} parent=51 // pred_fallthru
          _
      $region52: #{tpu_custom_call.1} parent=5 // pred_fallthru
        _
    $region6: #{tpu_custom_call.1} parent=1 // loop_footer
      %s20 = sadd.s32 1, %s16
    $region7: #{tpu_custom_call.1} parent=1 // loop_footer_branch
      %15 = sbr.rel target = $region3
    $region8: #{tpu_custom_call.1} parent=1 // loop_exit
      _
    %517 = vsyncpa [#allocation6], 1
    %s518 = scalar_lea.sflag [#allocation6], 1
    %519 = vsyncpa %s518, 1
    %520 = vsyncpa [#allocation9], 1
    %521 = vsyncpa [#allocation7], 1
    %s522 = scalar_lea.sflag [#allocation7], 1
    %523 = vsyncpa %s522, 1

</llo_original>
